<compile_context>
chip_gen: v5e
topology: v5e:2x2
jax: 0.10.0
libtpu: 0.0.40
codegen_flags: <defaults>
</compile_context>

<pallas_src>
import jax
import jax.numpy as jnp
from jax.experimental import pallas as pl
from jax.experimental.pallas import tpu as pltpu


def _round_up(x: int, m: int) -> int:
    return (x + m - 1) // m * m


def _cdiv(a: int, b: int) -> int:
    return (a + b - 1) // b


_NEG_LARGE = -1e30  # finite stand-in for -inf on padded vocab columns


def _vmem_budget_bytes() -> int:
    """~80% of this generation's physical VMEM (128 MiB v5e/v6e, 64 MiB v7x)."""
    try:
        cap = int(getattr(pltpu.get_tpu_info(), "vmem_capacity_bytes", 64 << 20))
    except Exception:
        cap = 64 << 20  # conservative (v7x per-TensorCore)
    return int(cap * 0.8)


def _resident_spec(block_shape, index_map):
    """BlockSpec for a block with a constant index map (DMA'd exactly once).

    pl.Buffered(1) turns off double-buffering for it, halving its VMEM
    footprint; fall back to a plain BlockSpec if this jax version rejects it.
    """
    if hasattr(pl, "Buffered"):
        try:
            return pl.BlockSpec(block_shape, index_map,
                                pipeline_mode=pl.Buffered(1))
        except Exception:
            pass
    return pl.BlockSpec(block_shape, index_map)


# --------------------- resident-weight path (vocab fits VMEM) ---------------------

def _proj_resident_kernel(x_ref, w_ref, b_ref, out_ref):
    # x: (TM, E) bf16, w: (E, V) bf16 (VMEM-resident), b: (1, V) f32, out: (TM, V)
    logits = jnp.dot(x_ref[...], w_ref[...],
                     preferred_element_type=jnp.float32) + b_ref[...]
    m = jnp.max(logits, axis=-1, keepdims=True)
    shifted = logits - m
    lse = jnp.log(jnp.sum(jnp.exp(shifted), axis=-1, keepdims=True))
    out_ref[...] = (shifted - lse).astype(out_ref.dtype)


def _run_resident(x2, w_t, b2, tm, out_dtype, vmem_limit):
    m_pad, E = x2.shape
    V = w_t.shape[1]
    return pl.pallas_call(
        _proj_resident_kernel,
        out_shape=jax.ShapeDtypeStruct((m_pad, V), out_dtype),
        grid_spec=pltpu.PrefetchScalarGridSpec(
            num_scalar_prefetch=0,
            grid=(m_pad // tm,),
            in_specs=[
                pl.BlockSpec((tm, E), lambda i: (i, 0)),    # activation row-chunk
                _resident_spec((E, V), lambda i: (0, 0)),   # weight: resident, 1 buffer
                _resident_spec((1, V), lambda i: (0, 0)),   # bias: resident, 1 buffer
            ],
            out_specs=pl.BlockSpec((tm, V), lambda i: (i, 0)),
        ),
        compiler_params=pltpu.CompilerParams(
            dimension_semantics=("parallel",),   # independent output tiles
            vmem_limit_bytes=int(vmem_limit),
        ),
    )(x2, w_t, b2)


# --------------------- V-tiled two-pass logsumexp path ---------------------

def _proj_lse_kernel(x_ref, w_ref, b_ref, lse_ref, m_scr, l_scr):
    # Online logsumexp across the V (reduction, last) grid axis.
    j = pl.program_id(1)

    @pl.when(j == 0)
    def _():
        m_scr[...] = jnp.full_like(m_scr, -jnp.inf)
        l_scr[...] = jnp.zeros_like(l_scr)

    logits = jnp.dot(x_ref[...], w_ref[...],
                     preferred_element_type=jnp.float32) + b_ref[...]
    m_new = jnp.maximum(m_scr[...], jnp.max(logits, axis=-1, keepdims=True))
    l_scr[...] = (l_scr[...] * jnp.exp(m_scr[...] - m_new)
                  + jnp.sum(jnp.exp(logits - m_new), axis=-1, keepdims=True))
    m_scr[...] = m_new

    @pl.when(j == pl.num_programs(1) - 1)
    def _():
        lse_ref[...] = m_scr[...] + jnp.log(l_scr[...])


def _proj_norm_kernel(x_ref, w_ref, b_ref, lse_ref, out_ref):
    # Recompute the logits tile and normalize; avoids a raw-logits HBM round trip.
    logits = jnp.dot(x_ref[...], w_ref[...],
                     preferred_element_type=jnp.float32) + b_ref[...]
    out_ref[...] = (logits - lse_ref[...]).astype(out_ref.dtype)


def _run_tiled(x2, w_t, b2, tm, tn, out_dtype, budget):
    m_pad, E = x2.shape
    v_pad = w_t.shape[1]
    grid = (m_pad // tm, v_pad // tn)
    out_isz = jnp.dtype(out_dtype).itemsize
    needed = (2 * tm * E * 2 + 2 * E * tn * 2 + 2 * tn * 4
              + 2 * tm * tn * out_isz + 4 * tm * 4 + (4 << 20))
    vmem_limit = int(min(budget, max(needed, 32 << 20)))

    # Pass 1: per-row logsumexp over the whole (padded) vocab.
    lse = pl.pallas_call(
        _proj_lse_kernel,
        out_shape=jax.ShapeDtypeStruct((m_pad, 1), jnp.float32),
        grid_spec=pltpu.PrefetchScalarGridSpec(
            num_scalar_prefetch=0,
            grid=grid,
            in_specs=[
                pl.BlockSpec((tm, E), lambda i, j: (i, 0)),
                pl.BlockSpec((E, tn), lambda i, j: (0, j)),
                pl.BlockSpec((1, tn), lambda i, j: (0, j)),
            ],
            out_specs=pl.BlockSpec((tm, 1), lambda i, j: (i, 0)),
            scratch_shapes=[pltpu.VMEM((tm, 1), jnp.float32),   # running max
                            pltpu.VMEM((tm, 1), jnp.float32)],  # running sum
        ),
        compiler_params=pltpu.CompilerParams(
            dimension_semantics=("parallel", "arbitrary"),
            vmem_limit_bytes=vmem_limit,
        ),
    )(x2, w_t, b2)

    # Pass 2: recompute logits and write the normalized log-probs.
    out = pl.pallas_call(
        _proj_norm_kernel,
        out_shape=jax.ShapeDtypeStruct((m_pad, v_pad), out_dtype),
        grid_spec=pltpu.PrefetchScalarGridSpec(
            num_scalar_prefetch=0,
            grid=grid,
            in_specs=[
                pl.BlockSpec((tm, E), lambda i, j: (i, 0)),
                pl.BlockSpec((E, tn), lambda i, j: (0, j)),
                pl.BlockSpec((1, tn), lambda i, j: (0, j)),
                pl.BlockSpec((tm, 1), lambda i, j: (i, 0)),
            ],
            out_specs=pl.BlockSpec((tm, tn), lambda i, j: (i, j)),
        ),
        compiler_params=pltpu.CompilerParams(
            # Both axes independent: v7x's two TensorCores can shard V as well.
            dimension_semantics=("parallel", "parallel"),
            vmem_limit_bytes=vmem_limit,
        ),
    )(x2, w_t, b2, lse)
    return out


# --------------------------------- wrapper ---------------------------------

def prepare_projection_params(weight, bias):
    """Pre-transpose / pre-cast the Linear params for the kernel.

    In a real model, call this ONCE (or store the weight already transposed and
    in bf16) so the (E, V) transpose is not an extra HBM round trip per forward.
    """
    V = weight.shape[0]
    w_t = weight.T.astype(jnp.bfloat16)            # (E, V): vocab on the lane axis
    b2 = bias.reshape(1, V).astype(jnp.float32)    # bias added in f32 post-MXU
    return w_t, b2


def projection_layer(x, weight, bias, *, block_m=256, block_v=2048,
                     out_dtype=None, force_tiled=False):
    """out = log_softmax(x @ weight.T + bias, axis=-1); x: (B,S,E) -> (B,S,V)."""
    B, S, E = x.shape
    V, E_w = weight.shape
    assert E == E_w, "weight must be (vocab_size, embed_size)"
    out_dtype = x.dtype if out_dtype is None else jnp.dtype(out_dtype)
    out_isz = jnp.dtype(out_dtype).itemsize

    M = B * S
    # Balanced row-chunk (multiple of 8) that minimizes padding:
    # e.g. M=300 -> tm=152, pad to 304 (not 512).
    tm = _round_up(_cdiv(M, _cdiv(M, block_m)), 8)
    m_pad = _round_up(M, tm)

    x2 = x.reshape(M, E)
    if m_pad != M:
        x2 = jnp.pad(x2, ((0, m_pad - M), (0, 0)))
    x2 = x2.astype(jnp.bfloat16)                   # bf16 MXU operand

    w_t, b2 = prepare_projection_params(weight, bias)

    budget = _vmem_budget_bytes()
    # Resident-path footprint: double-buffered x/out tiles, single-buffered
    # resident bf16 weight + f32 bias, plus compiler headroom.
    resident_bytes = (2 * tm * E * 2 + 2 * tm * V * out_isz
                      + E * V * 2 + V * 4 + (4 << 20))

    if not force_tiled and resident_bytes <= budget:
        try:
            out = _run_resident(
                x2, w_t, b2, tm, out_dtype,
                vmem_limit=min(budget, max(resident_bytes, 32 << 20)))
            return out[:M].reshape(B, S, V)
        except Exception:
            # e.g. pl.Buffered(1) not supported by this jax version / unexpected
            # VMEM pressure -> fall back to the V-tiled two-pass path below.
            pass

    # V-tiled two-pass logsumexp path (vocab too large to keep resident).
    tn = min(_round_up(block_v, 128), _round_up(V, 128))
    while tn > 128 and (2 * tm * E * 2 + 2 * E * tn * 2 + 2 * tn * 4
                        + 2 * tm * tn * out_isz + (4 << 20)) > budget:
        tn = max(128, tn // 2)
    v_pad = _round_up(V, tn)
    if v_pad != V:
        w_t = jnp.pad(w_t, ((0, 0), (0, v_pad - V)))
        # Padded columns get a hugely negative bias: exp() underflows to 0 so
        # they don't perturb the logsumexp; they are sliced off afterwards.
        b2 = jnp.pad(b2, ((0, 0), (0, v_pad - V)), constant_values=_NEG_LARGE)
    out = _run_tiled(x2, w_t, b2, tm, tn, out_dtype, budget)
    return out[:M, :V].reshape(B, S, V)


if __name__ == "__main__":
    key = jax.random.PRNGKey(0)
    k_x, k_w, k_b = jax.random.split(key, 3)

    # Small, TPU-friendly shapes consistent with the module's forward.
    batch, seq = 2, 8
    embed_size = 128
    vocab_size = 256

    x = jax.random.normal(k_x, (batch, seq, embed_size), dtype=jnp.float32)
    weight = jax.random.normal(k_w, (vocab_size, embed_size), dtype=jnp.float32) * 0.05
    bias = jax.random.normal(k_b, (vocab_size,), dtype=jnp.float32) * 0.05

    # Reference (plain JAX f32) == the PyTorch module's forward.
    ref = jax.nn.log_softmax(jnp.einsum("bse,ve->bsv", x, weight) + bias, axis=-1)

    # Resident-weight fast path.
    out = jax.block_until_ready(projection_layer(x, weight, bias))
    assert out.shape == (batch, seq, vocab_size)
    assert jnp.allclose(out, ref, atol=3e-2, rtol=0), float(jnp.max(jnp.abs(out - ref)))

    # V-tiled online-logsumexp path (large-vocab / v7x strategy), forced here on
    # small shapes so both code paths are exercised and checked.
    out_t = jax.block_until_ready(
        projection_layer(x, weight, bias, force_tiled=True, block_v=128))
    assert out_t.shape == (batch, seq, vocab_size)
    assert jnp.allclose(out_t, ref, atol=3e-2, rtol=0), float(jnp.max(jnp.abs(out_t - ref)))

    print("KERNEL_OK")
</pallas_src>

<mosaic_0001>
module attributes {stable_mosaic.version = 11 : i64} {
  func.func @_proj_resident_kernel(%arg0: i32, %arg1: memref<16x128xbf16, #tpu.memory_space<vmem>>, %arg2: memref<128x256xbf16, #tpu.memory_space<vmem>>, %arg3: memref<1x256xf32, #tpu.memory_space<vmem>>, %arg4: memref<16x256xf32, #tpu.memory_space<vmem>>) attributes {dimension_semantics = [#tpu.dimension_semantics<parallel>], iteration_bounds = array<i64: 1>, scalar_prefetch = 0 : i64, scratch_operands = 0 : i64, tpu.core_type = #tpu.core_type<tc>, window_params = [{transform_indices = @transform_0, window_bounds = array<i64: 16, 128>}, {pipeline_mode = #tpu.pipeline_mode<synchronous>, transform_indices = @transform_1, window_bounds = array<i64: 128, 256>}, {pipeline_mode = #tpu.pipeline_mode<synchronous>, transform_indices = @transform_2, window_bounds = array<i64: 1, 256>}, {transform_indices = @transform_3, window_bounds = array<i64: 16, 256>}]} {
    %c0 = arith.constant 0 : index
    %c0_0 = arith.constant 0 : index
    %0 = vector.load %arg1[%c0, %c0_0] : memref<16x128xbf16, #tpu.memory_space<vmem>>, vector<16x128xbf16>
    %c0_1 = arith.constant 0 : index
    %c0_2 = arith.constant 0 : index
    %1 = vector.load %arg2[%c0_1, %c0_2] : memref<128x256xbf16, #tpu.memory_space<vmem>>, vector<128x256xbf16>
    %cst = arith.constant dense<0.000000e+00> : vector<16x256xf32>
    %2 = tpu.matmul %0, %1, %cst {dimension_numbers = #tpu.dot_dimension_numbers<[1], [0], [0], [1], [0, 0, 1, 1], [], []>} : vector<16x128xbf16>, vector<128x256xbf16>, vector<16x256xf32> -> vector<16x256xf32>
    %c0_3 = arith.constant 0 : index
    %c0_4 = arith.constant 0 : index
    %3 = vector.load %arg3[%c0_3, %c0_4] : memref<1x256xf32, #tpu.memory_space<vmem>>, vector<1x256xf32>
    %4 = vector.broadcast %3 : vector<1x256xf32> to vector<16x256xf32>
    %5 = arith.addf %2, %4 : vector<16x256xf32>
    %cst_5 = arith.constant dense<0xFF800000> : vector<16xf32>
    %6 = vector.multi_reduction <maximumf>, %5, %cst_5 [1] : vector<16x256xf32> to vector<16xf32>
    %7 = vector.shape_cast %6 : vector<16xf32> to vector<16x1xf32>
    %8 = vector.broadcast %7 : vector<16x1xf32> to vector<16x256xf32>
    %9 = arith.subf %5, %8 : vector<16x256xf32>
    %10 = math.exp %9 : vector<16x256xf32>
    %cst_6 = arith.constant dense<0.000000e+00> : vector<16xf32>
    %11 = vector.multi_reduction <add>, %10, %cst_6 [1] : vector<16x256xf32> to vector<16xf32>
    %12 = vector.shape_cast %11 : vector<16xf32> to vector<16x1xf32>
    %13 = math.log %12 : vector<16x1xf32>
    %14 = vector.broadcast %13 : vector<16x1xf32> to vector<16x256xf32>
    %15 = arith.subf %9, %14 : vector<16x256xf32>
    %c0_7 = arith.constant 0 : index
    %c0_8 = arith.constant 0 : index
    %16 = vector.load %arg4[%c0_7, %c0_8] : memref<16x256xf32, #tpu.memory_space<vmem>>, vector<16x256xf32>
    tpu.vector_store %arg4[%c0_7, %c0_8], %15 {strides = array<i32>} : memref<16x256xf32, #tpu.memory_space<vmem>>, vector<16x256xf32>,
    return
  }
  func.func @transform_0(%arg0: i32) -> (i32, i32) {
    %c0_i32 = arith.constant 0 : i32
    %c0_i32_0 = arith.constant 0 : i32
    return %arg0, %c0_i32 : i32, i32
  }
  func.func @transform_1(%arg0: i32) -> (i32, i32) {
    %c0_i32 = arith.constant 0 : i32
    %c0_i32_0 = arith.constant 0 : i32
    %c0_i32_1 = arith.constant 0 : i32
    return %c0_i32, %c0_i32_0 : i32, i32
  }
  func.func @transform_2(%arg0: i32) -> (i32, i32) {
    %c0_i32 = arith.constant 0 : i32
    %c0_i32_0 = arith.constant 0 : i32
    %c0_i32_1 = arith.constant 0 : i32
    return %c0_i32, %c0_i32_0 : i32, i32
  }
  func.func @transform_3(%arg0: i32) -> (i32, i32) {
    %c0_i32 = arith.constant 0 : i32
    %c0_i32_0 = arith.constant 0 : i32
    return %arg0, %c0_i32 : i32, i32
  }
}

module attributes {stable_mosaic.version = 11 : i64} {
  func.func @_proj_lse_kernel(%arg0: i32, %arg1: i32, %arg2: memref<16x128xbf16, #tpu.memory_space<vmem>>, %arg3: memref<128x256xbf16, #tpu.memory_space<vmem>>, %arg4: memref<1x256xf32, #tpu.memory_space<vmem>>, %arg5: memref<16x1xf32, #tpu.memory_space<vmem>>, %arg6: memref<16x1xf32, #tpu.memory_space<vmem>>, %arg7: memref<16x1xf32, #tpu.memory_space<vmem>>) attributes {dimension_semantics = [#tpu.dimension_semantics<parallel>, #tpu.dimension_semantics<arbitrary>], iteration_bounds = array<i64: 1, 1>, scalar_prefetch = 0 : i64, scratch_operands = 2 : i64, tpu.core_type = #tpu.core_type<tc>, window_params = [{transform_indices = @transform_0, window_bounds = array<i64: 16, 128>}, {transform_indices = @transform_1, window_bounds = array<i64: 128, 256>}, {transform_indices = @transform_2, window_bounds = array<i64: 1, 256>}, {transform_indices = @transform_3, window_bounds = array<i64: 16, 1>}]} {
    %c0_i32 = arith.constant 0 : i32
    %0 = arith.cmpi eq, %arg1, %c0_i32 : i32
    %1 = arith.extui %0 : i1 to i32
    %c0_i32_0 = arith.constant 0 : i32
    %2 = arith.cmpi ne, %1, %c0_i32_0 : i32
    scf.if %2 {
      %cst_20 = arith.constant 0xFF800000 : f32
      %29 = vector.broadcast %cst_20 : f32 to vector<16x1xf32>
      %c0_21 = arith.constant 0 : index
      %c0_22 = arith.constant 0 : index
      %30 = vector.load %arg6[%c0_21, %c0_22] : memref<16x1xf32, #tpu.memory_space<vmem>>, vector<16x1xf32>
      tpu.vector_store %arg6[%c0_21, %c0_22], %29 {strides = array<i32>} : memref<16x1xf32, #tpu.memory_space<vmem>>, vector<16x1xf32>,
      %cst_23 = arith.constant 0.000000e+00 : f32
      %31 = vector.broadcast %cst_23 : f32 to vector<16x1xf32>
      %c0_24 = arith.constant 0 : index
      %c0_25 = arith.constant 0 : index
      %32 = vector.load %arg7[%c0_24, %c0_25] : memref<16x1xf32, #tpu.memory_space<vmem>>, vector<16x1xf32>
      tpu.vector_store %arg7[%c0_24, %c0_25], %31 {strides = array<i32>} : memref<16x1xf32, #tpu.memory_space<vmem>>, vector<16x1xf32>,
    } else {
    }
    %c0 = arith.constant 0 : index
    %c0_1 = arith.constant 0 : index
    %3 = vector.load %arg2[%c0, %c0_1] : memref<16x128xbf16, #tpu.memory_space<vmem>>, vector<16x128xbf16>
    %c0_2 = arith.constant 0 : index
    %c0_3 = arith.constant 0 : index
    %4 = vector.load %arg3[%c0_2, %c0_3] : memref<128x256xbf16, #tpu.memory_space<vmem>>, vector<128x256xbf16>
    %cst = arith.constant dense<0.000000e+00> : vector<16x256xf32>
    %5 = tpu.matmul %3, %4, %cst {dimension_numbers = #tpu.dot_dimension_numbers<[1], [0], [0], [1], [0, 0, 1, 1], [], []>} : vector<16x128xbf16>, vector<128x256xbf16>, vector<16x256xf32> -> vector<16x256xf32>
    %c0_4 = arith.constant 0 : index
    %c0_5 = arith.constant 0 : index
    %6 = vector.load %arg4[%c0_4, %c0_5] : memref<1x256xf32, #tpu.memory_space<vmem>>, vector<1x256xf32>
    %7 = vector.broadcast %6 : vector<1x256xf32> to vector<16x256xf32>
    %8 = arith.addf %5, %7 : vector<16x256xf32>
    %c0_6 = arith.constant 0 : index
    %c0_7 = arith.constant 0 : index
    %9 = vector.load %arg6[%c0_6, %c0_7] : memref<16x1xf32, #tpu.memory_space<vmem>>, vector<16x1xf32>
    %cst_8 = arith.constant dense<0xFF800000> : vector<16xf32>
    %10 = vector.multi_reduction <maximumf>, %8, %cst_8 [1] : vector<16x256xf32> to vector<16xf32>
    %11 = vector.shape_cast %10 : vector<16xf32> to vector<16x1xf32>
    %12 = arith.maximumf %9, %11 : vector<16x1xf32>
    %c0_9 = arith.constant 0 : index
    %c0_10 = arith.constant 0 : index
    %13 = vector.load %arg7[%c0_9, %c0_10] : memref<16x1xf32, #tpu.memory_space<vmem>>, vector<16x1xf32>
    %c0_11 = arith.constant 0 : index
    %c0_12 = arith.constant 0 : index
    %14 = vector.load %arg6[%c0_11, %c0_12] : memref<16x1xf32, #tpu.memory_space<vmem>>, vector<16x1xf32>
    %15 = arith.subf %14, %12 : vector<16x1xf32>
    %16 = math.exp %15 : vector<16x1xf32>
    %17 = arith.mulf %13, %16 : vector<16x1xf32>
    %18 = vector.broadcast %12 : vector<16x1xf32> to vector<16x256xf32>
    %19 = arith.subf %8, %18 : vector<16x256xf32>
    %20 = math.exp %19 : vector<16x256xf32>
    %cst_13 = arith.constant dense<0.000000e+00> : vector<16xf32>
    %21 = vector.multi_reduction <add>, %20, %cst_13 [1] : vector<16x256xf32> to vector<16xf32>
    %22 = vector.shape_cast %21 : vector<16xf32> to vector<16x1xf32>
    %23 = arith.addf %17, %22 : vector<16x1xf32>
    %c0_14 = arith.constant 0 : index
    %c0_15 = arith.constant 0 : index
    %24 = vector.load %arg7[%c0_14, %c0_15] : memref<16x1xf32, #tpu.memory_space<vmem>>, vector<16x1xf32>
    tpu.vector_store %arg7[%c0_14, %c0_15], %23 {strides = array<i32>} : memref<16x1xf32, #tpu.memory_space<vmem>>, vector<16x1xf32>,
    %c0_16 = arith.constant 0 : index
    %c0_17 = arith.constant 0 : index
    %25 = vector.load %arg6[%c0_16, %c0_17] : memref<16x1xf32, #tpu.memory_space<vmem>>, vector<16x1xf32>
    tpu.vector_store %arg6[%c0_16, %c0_17], %12 {strides = array<i32>} : memref<16x1xf32, #tpu.memory_space<vmem>>, vector<16x1xf32>,
    %c0_i32_18 = arith.constant 0 : i32
    %26 = arith.cmpi eq, %arg1, %c0_i32_18 : i32
    %27 = arith.extui %26 : i1 to i32
    %c0_i32_19 = arith.constant 0 : i32
    %28 = arith.cmpi ne, %27, %c0_i32_19 : i32
    scf.if %28 {
      %c0_20 = arith.constant 0 : index
      %c0_21 = arith.constant 0 : index
      %29 = vector.load %arg6[%c0_20, %c0_21] : memref<16x1xf32, #tpu.memory_space<vmem>>, vector<16x1xf32>
      %c0_22 = arith.constant 0 : index
      %c0_23 = arith.constant 0 : index
      %30 = vector.load %arg7[%c0_22, %c0_23] : memref<16x1xf32, #tpu.memory_space<vmem>>, vector<16x1xf32>
      %31 = math.log %30 : vector<16x1xf32>
      %32 = arith.addf %29, %31 : vector<16x1xf32>
      %c0_24 = arith.constant 0 : index
      %c0_25 = arith.constant 0 : index
      %33 = vector.load %arg5[%c0_24, %c0_25] : memref<16x1xf32, #tpu.memory_space<vmem>>, vector<16x1xf32>
      tpu.vector_store %arg5[%c0_24, %c0_25], %32 {strides = array<i32>} : memref<16x1xf32, #tpu.memory_space<vmem>>, vector<16x1xf32>,
    } else {
    }
    return
  }
  func.func @transform_0(%arg0: i32, %arg1: i32) -> (i32, i32) {
    %c0_i32 = arith.constant 0 : i32
    %c0_i32_0 = arith.constant 0 : i32
    return %arg0, %c0_i32 : i32, i32
  }
  func.func @transform_1(%arg0: i32, %arg1: i32) -> (i32, i32) {
    %c0_i32 = arith.constant 0 : i32
    %c0_i32_0 = arith.constant 0 : i32
    return %c0_i32, %arg1 : i32, i32
  }
  func.func @transform_2(%arg0: i32, %arg1: i32) -> (i32, i32) {
    %c0_i32 = arith.constant 0 : i32
    %c0_i32_0 = arith.constant 0 : i32
    return %c0_i32, %arg1 : i32, i32
  }
  func.func @transform_3(%arg0: i32, %arg1: i32) -> (i32, i32) {
    %c0_i32 = arith.constant 0 : i32
    %c0_i32_0 = arith.constant 0 : i32
    return %arg0, %c0_i32 : i32, i32
  }
}

</mosaic_0001>

<llo_original>
// kernel: tpu_custom_call.1
$region0: #{tpu_custom_call.1}
  #allocation0 [shape = 'u32[]', space=smem, size = 0x4, offset = 0x4, fixed_abs, tag = 'smem constant byte address 0x4 - core index']
  #allocation1 [shape = 'u32[72,128]{1,0:T(1,128)}', space=vmem, size = 0x9000, scoped, tag = 'internal scratch']
  %s0 = inlined_call_operand.hbm [shape: bf16[16,128], index: 0, kind: input, shape index: {}]
  %s1 = inlined_call_operand.hbm [shape: bf16[128,256], index: 1, kind: input, shape index: {}]
  %s2 = inlined_call_operand.hbm [shape: f32[1,256], index: 2, kind: input, shape index: {}]
  %s3 = inlined_call_operand.hbm [shape: f32[16,256], index: 3, kind: output, shape index: {}]
  %s4 = sld [smem:[#allocation0]]
  $region34: #{tpu_custom_call.1} parent=0
    _
  %s6 = ssub.s32 1, %s4
  %s7 = scalar_select 0, %s6, %s4
  $region1: #{tpu_custom_call.1} parent=0
    #allocation2 [shape = 'u8[4096]{0}', space=vmem, size = 0x1000, scoped, tag = 'input window, operand 0, single buffered']
    #allocation3 [shape = 's32[1]{0}', space=sflag, size = 0x4, scoped, tag = 'scoped memory for tpu_custom_call.1']
    #allocation4 [shape = 's32[1]{0}', space=sflag, size = 0x4, scoped, tag = 'scoped memory for tpu_custom_call.1']
    #allocation5 [shape = 'u8[65536]{0}', space=vmem, size = 0x10000, scoped, tag = 'input window, operand 1, single buffered']
    #allocation6 [shape = 's32[1]{0}', space=sflag, size = 0x4, scoped, tag = 'scoped memory for tpu_custom_call.1']
    #allocation7 [shape = 'u8[1024]{0}', space=vmem, size = 0x400, scoped, tag = 'input window, operand 2, single buffered']
    #allocation8 [shape = 'u8[16384]{0}', space=vmem, size = 0x4000, scoped, tag = 'output window, operand 0, single buffered']
    %8 = vsyncpa [#allocation3], 0
    %9 = vsyncpa [#allocation6], 0
    %10 = vsyncpa [#allocation4], 0
    // Predicated region
    $region2: #{tpu_custom_call.1} parent=1 // pred_check
      _
    $region3: #{tpu_custom_call.1} parent=1 // pred_check_branch
      %12 = sbr.rel (0) target = $region5
    $region4: #{tpu_custom_call.1} parent=1 // pred_region
      %14 = vsyncadd [#allocation3], 0
      %s15 = sshll.u32 %s0, 4
      %s16 = int_to_ptr.hbm [resolvable:$true] %s15
      %s17 = sshll.u32 [#allocation2], 4
      %s18 = int_to_ptr.vmem [resolvable:$true] %s17
      %23 = dma.hbm_to_vmem [thread:$0]  %s16, 128, %s18, [#allocation3], 64, 64, 4
    $region5: #{tpu_custom_call.1} parent=1 // pred_fallthru
      _
    // Predicated region
    $region6: #{tpu_custom_call.1} parent=1 // pred_check
      _
    $region7: #{tpu_custom_call.1} parent=1 // pred_check_branch
      %25 = sbr.rel (0) target = $region9
    $region8: #{tpu_custom_call.1} parent=1 // pred_region
      %27 = vsyncadd [#allocation6], 0
      %s28 = sshll.u32 %s1, 4
      %s29 = int_to_ptr.hbm [resolvable:$true] %s28
      %s30 = sshll.u32 [#allocation5], 4
      %s31 = int_to_ptr.vmem [resolvable:$true] %s30
      %36 = dma.hbm_to_vmem [thread:$0]  %s29, 2048, %s31, [#allocation6], 128, 128, 8
    $region9: #{tpu_custom_call.1} parent=1 // pred_fallthru
      _
    // Predicated region
    $region10: #{tpu_custom_call.1} parent=1 // pred_check
      _
    $region11: #{tpu_custom_call.1} parent=1 // pred_check_branch
      %38 = sbr.rel (0) target = $region13
    $region12: #{tpu_custom_call.1} parent=1 // pred_region
      %40 = vsyncadd [#allocation6], 0
      %s42 = sshll.u32 %s2, 4
      %s43 = int_to_ptr.hbm [resolvable:$true] %s42
      %s44 = sshll.u32 [#allocation7], 4
      %s45 = int_to_ptr.vmem [resolvable:$true] %s44
      %47 = dma.hbm_to_vmem [thread:$0]  %s43, 32, %s45, [#allocation6]
    $region13: #{tpu_custom_call.1} parent=1 // pred_fallthru
      _
    // Predicated region
    $region14: #{tpu_custom_call.1} parent=1 // pred_check
      _
    $region15: #{tpu_custom_call.1} parent=1 // pred_check_branch
      %49 = sbr.rel (0) target = $region17
    $region16: #{tpu_custom_call.1} parent=1 // pred_region
      %51 = dma.done [#allocation3], 128
    $region17: #{tpu_custom_call.1} parent=1 // pred_fallthru
      _
    // Predicated region
    $region18: #{tpu_custom_call.1} parent=1 // pred_check
      _
    $region19: #{tpu_custom_call.1} parent=1 // pred_check_branch
      %53 = sbr.rel (0) target = $region21
    $region20: #{tpu_custom_call.1} parent=1 // pred_region
      %55 = dma.done [#allocation6], 2048
    $region21: #{tpu_custom_call.1} parent=1 // pred_fallthru
      _
    // Predicated region
    $region22: #{tpu_custom_call.1} parent=1 // pred_check
      _
    $region23: #{tpu_custom_call.1} parent=1 // pred_check_branch
      %57 = sbr.rel (0) target = $region25
    $region24: #{tpu_custom_call.1} parent=1 // pred_region
      %59 = dma.done [#allocation6], 32
    $region25: #{tpu_custom_call.1} parent=1 // pred_fallthru
      _
    %v60 = vld [vmem:[#allocation2] sm:$0xf]
    %v61 = vld [vmem:[#allocation2 + $0x4] sm:$0xf]
    %v62 = vld [vmem:[#allocation5] sm:$0xff]
    %v63 = vld [vmem:[#allocation5 + $0x8] sm:$0xff]
    %v64 = vld [vmem:[#allocation5 + $0x10] sm:$0xff]
    %v65 = vld [vmem:[#allocation5 + $0x18] sm:$0xff]
    %v66 = vld [vmem:[#allocation5 + $0x20] sm:$0xff]
    %v67 = vld [vmem:[#allocation5 + $0x28] sm:$0xff]
    %v68 = vld [vmem:[#allocation5 + $0x30] sm:$0xff]
    %v69 = vld [vmem:[#allocation5 + $0x38] sm:$0xff]
    %v70 = vld [vmem:[#allocation5 + $0x40] sm:$0xff]
    %v71 = vld [vmem:[#allocation5 + $0x48] sm:$0xff]
    %v72 = vld [vmem:[#allocation5 + $0x50] sm:$0xff]
    %v73 = vld [vmem:[#allocation5 + $0x58] sm:$0xff]
    %v74 = vld [vmem:[#allocation5 + $0x60] sm:$0xff]
    %v75 = vld [vmem:[#allocation5 + $0x68] sm:$0xff]
    %v76 = vld [vmem:[#allocation5 + $0x70] sm:$0xff]
    %v77 = vld [vmem:[#allocation5 + $0x78] sm:$0xff]
    %v78 = vld [vmem:[#allocation7] sm:$0x3]
    %v80 = vperm.slane %v78, 0
    %v81 = vperm.slane %v78, 1
    %v86 = vunpack.c.l.b16 %v60
    %v87 = vunpack.c.l.b16 %v61
    %v88 = vpack.c.b16 %v87, %v86
    %v106 = vunpack.c.l.b16 %v62
    %v107 = vunpack.c.h.b16 %v62
    %v108 = vunpack.c.l.b16 %v63
    %v109 = vunpack.c.h.b16 %v63
    %v110 = vunpack.c.l.b16 %v64
    %v111 = vunpack.c.h.b16 %v64
    %v112 = vunpack.c.l.b16 %v65
    %v113 = vunpack.c.h.b16 %v65
    %v114 = vunpack.c.l.b16 %v66
    %v115 = vunpack.c.h.b16 %v66
    %v116 = vunpack.c.l.b16 %v67
    %v117 = vunpack.c.h.b16 %v67
    %v118 = vunpack.c.l.b16 %v68
    %v119 = vunpack.c.h.b16 %v68
    %v120 = vunpack.c.l.b16 %v69
    %v121 = vunpack.c.h.b16 %v69
    %v122 = vunpack.c.l.b16 %v70
    %v123 = vunpack.c.h.b16 %v70
    %v124 = vunpack.c.l.b16 %v71
    %v125 = vunpack.c.h.b16 %v71
    %v126 = vunpack.c.l.b16 %v72
    %v127 = vunpack.c.h.b16 %v72
    %v128 = vunpack.c.l.b16 %v73
    %v129 = vunpack.c.h.b16 %v73
    %v130 = vunpack.c.l.b16 %v74
    %v131 = vunpack.c.h.b16 %v74
    %v132 = vunpack.c.l.b16 %v75
    %v133 = vunpack.c.h.b16 %v75
    %v134 = vunpack.c.l.b16 %v76
    %v135 = vunpack.c.h.b16 %v76
    %v136 = vunpack.c.l.b16 %v77
    %v137 = vunpack.c.h.b16 %v77
    %v138 = vpack.c.b16 %v108, %v106
    %v139 = vpack.c.b16 %v109, %v107
    %v140 = vpack.c.b16 %v112, %v110
    %v141 = vpack.c.b16 %v113, %v111
    %v142 = vpack.c.b16 %v116, %v114
    %v143 = vpack.c.b16 %v117, %v115
    %v144 = vpack.c.b16 %v120, %v118
    %v145 = vpack.c.b16 %v121, %v119
    %v146 = vpack.c.b16 %v124, %v122
    %v147 = vpack.c.b16 %v125, %v123
    %v148 = vpack.c.b16 %v128, %v126
    %v149 = vpack.c.b16 %v129, %v127
    %v150 = vpack.c.b16 %v132, %v130
    %v151 = vpack.c.b16 %v133, %v131
    %v152 = vpack.c.b16 %v136, %v134
    %v153 = vpack.c.b16 %v137, %v135
    %170 = vmatpush.bf16.msra.mxu0 %v152
    %171 = vmatpush.bf16.msra.mxu0 %v150
    %172 = vmatpush.bf16.msra.mxu0 %v148
    %173 = vmatpush.bf16.msra.mxu0 %v146
    %174 = vmatpush.bf16.msra.mxu0 %v144
    %175 = vmatpush.bf16.msra.mxu0 %v142
    %176 = vmatpush.bf16.msra.mxu0 %v140
    %177 = vmatpush.bf16.msra.mxu0 %v138
    %178 = vmatmul.bf16.gmra.mxu0 %v88
    %v179 = vpop.f32.mrf.mxu0
    %v180 = vadd.f32 %v80, %v179
    %v181 = vpop.f32.mrf.mxu0
    %v182 = vadd.f32 %v80, %v181
    %183 = vdwg.mxu0
    %184 = vmatpush.bf16.msra.mxu0 %v153
    %185 = vmatpush.bf16.msra.mxu0 %v151
    %186 = vmatpush.bf16.msra.mxu0 %v149
    %187 = vmatpush.bf16.msra.mxu0 %v147
    %188 = vmatpush.bf16.msra.mxu0 %v145
    %189 = vmatpush.bf16.msra.mxu0 %v143
    %190 = vmatpush.bf16.msra.mxu0 %v141
    %191 = vmatpush.bf16.msra.mxu0 %v139
    %192 = vmatmul.bf16.gmra.mxu0 %v88
    %v193 = vpop.f32.mrf.mxu0
    %v194 = vadd.f32 %v81, %v193
    %v195 = vpop.f32.mrf.mxu0
    %v196 = vadd.f32 %v81, %v195
    %197 = vdwg.mxu0
    %v198 = vmax.f32 %v180, %v194
    %199 = vmax.xlane.f32.xlu0 %v198
    %v200 = vpop.xlane.xlu0 %199
    %v201 = vmax.f32 %v182, %v196
    %202 = vmax.xlane.f32.xlu0 %v201
    %v203 = vpop.xlane.xlu0 %202
    %v204 = vsub.f32 %v180, %v200
    %v205 = vsub.f32 %v194, %v200
    %v206 = vsub.f32 %v182, %v203
    %v207 = vsub.f32 %v196, %v203
    %v208 = vmul.f32 %v204, 1.442695
    %v209 = vpow.pop %v208
    %v210 = vmul.f32 %v205, 1.442695
    %v211 = vpow.pop %v210
    %v212 = vmul.f32 %v206, 1.442695
    %v213 = vpow.pop %v212
    %v214 = vmul.f32 %v207, 1.442695
    %v215 = vpow.pop %v214
    %v216 = vadd.f32 %v209, %v211
    %217 = vadd.xlane.f32.xlu0 %v216
    %v218 = vpop.xlane.xlu0 %217
    %v219 = vadd.f32 %v213, %v215
    %220 = vadd.xlane.f32.xlu0 %v219
    %v221 = vpop.xlane.xlu0 %220
    %v222 = vlog2.pop %v218
    %v223 = vmul.f32 %v222, 0.6931472
    %v224 = vlog2.pop %v221
    %v225 = vmul.f32 %v224, 0.6931472
    %v226 = vsub.f32 %v204, %v223
    %v227 = vsub.f32 %v205, %v223
    %v228 = vsub.f32 %v206, %v225
    %v229 = vsub.f32 %v207, %v225
    %230 = vst [vmem:[#allocation8] sm:$0xff] %v226
    %231 = vst [vmem:[#allocation8 + $0x8] sm:$0xff] %v227
    %232 = vst [vmem:[#allocation8 + $0x10] sm:$0xff] %v228
    %233 = vst [vmem:[#allocation8 + $0x18] sm:$0xff] %v229
    // Predicated region
    $region26: #{tpu_custom_call.1} parent=1 // pred_check
      _
    $region27: #{tpu_custom_call.1} parent=1 // pred_check_branch
      %235 = sbr.rel (0) target = $region29
    $region28: #{tpu_custom_call.1} parent=1 // pred_region
      %237 = vsyncadd [#allocation4], 0
      %s238 = sshll.u32 [#allocation8], 4
      %s239 = int_to_ptr.vmem [resolvable:$true] %s238
      %s240 = sshll.u32 %s3, 4
      %s241 = int_to_ptr.hbm [resolvable:$true] %s240
      %246 = dma.vmem_to_hbm [thread:$0]  %s239, 512, %s241, [#allocation4], 256, 256, 16
    $region29: #{tpu_custom_call.1} parent=1 // pred_fallthru
      _
    // Predicated region
    $region30: #{tpu_custom_call.1} parent=1 // pred_check
      _
    $region31: #{tpu_custom_call.1} parent=1 // pred_check_branch
      %248 = sbr.rel (0) target = $region33
    $region32: #{tpu_custom_call.1} parent=1 // pred_region
      %250 = dma.done [#allocation4], 512
    $region33: #{tpu_custom_call.1} parent=1 // pred_fallthru
      _
    %251 = vsyncpa [#allocation3], 1
    %252 = vsyncpa [#allocation6], 1
    %253 = vsyncpa [#allocation4], 1

// kernel: tpu_custom_call.1
$region0: #{tpu_custom_call.1}
  #allocation0 [shape = 'u32[]', space=smem, size = 0x4, offset = 0x4, fixed_abs, tag = 'smem constant byte address 0x4 - core index']
  #allocation1 [shape = 'u32[72,128]{1,0:T(1,128)}', space=vmem, size = 0x9000, scoped, tag = 'internal scratch']
  #allocation2 [shape = 'f32[16,1]{1,0:T(8,128)}', space=vmem, size = 0x2000, scoped, tag = 'scratch operand']
  #allocation3 [shape = 'f32[16,1]{1,0:T(8,128)}', space=vmem, size = 0x2000, scoped, tag = 'scratch operand']
  %s0 = inlined_call_operand.hbm [shape: bf16[16,128], index: 0, kind: input, shape index: {}]
  %s1 = inlined_call_operand.hbm [shape: bf16[128,256], index: 1, kind: input, shape index: {}]
  %s2 = inlined_call_operand.hbm [shape: f32[1,256], index: 2, kind: input, shape index: {}]
  %s3 = inlined_call_operand.vmem [shape: f32[16,1], index: 3, kind: output, shape index: {}]
  %s4 = sld [smem:[#allocation0]]
  $region42: #{tpu_custom_call.1} parent=0
    _
  %s6 = ssub.s32 1, %s4
  %s7 = scalar_select 0, %s6, %s4
  $region1: #{tpu_custom_call.1} parent=0
    #allocation4 [shape = 'u8[4096]{0}', space=vmem, size = 0x1000, scoped, tag = 'input window, operand 0, single buffered']
    #allocation5 [shape = 's32[1]{0}', space=sflag, size = 0x4, scoped, tag = 'scoped memory for tpu_custom_call.1']
    #allocation6 [shape = 'u8[65536]{0}', space=vmem, size = 0x10000, scoped, tag = 'input window, operand 1, single buffered']
    #allocation7 [shape = 's32[1]{0}', space=sflag, size = 0x4, scoped, tag = 'scoped memory for tpu_custom_call.1']
    #allocation8 [shape = 'u8[1024]{0}', space=vmem, size = 0x400, scoped, tag = 'input window, operand 2, single buffered']
    %8 = vsyncpa [#allocation5], 0
    %9 = vsyncpa [#allocation7], 0
    // Predicated region
    $region2: #{tpu_custom_call.1} parent=1 // pred_check
      _
    $region3: #{tpu_custom_call.1} parent=1 // pred_check_branch
      %11 = sbr.rel (0) target = $region5
    $region4: #{tpu_custom_call.1} parent=1 // pred_region
      %13 = vsyncadd [#allocation5], 0
      %s14 = sshll.u32 %s0, 4
      %s15 = int_to_ptr.hbm [resolvable:$true] %s14
      %s16 = sshll.u32 [#allocation4], 4
      %s17 = int_to_ptr.vmem [resolvable:$true] %s16
      %22 = dma.hbm_to_vmem [thread:$0]  %s15, 128, %s17, [#allocation5], 64, 64, 4
    $region5: #{tpu_custom_call.1} parent=1 // pred_fallthru
      _
    // Predicated region
    $region6: #{tpu_custom_call.1} parent=1 // pred_check
      _
    $region7: #{tpu_custom_call.1} parent=1 // pred_check_branch
      %24 = sbr.rel (0) target = $region9
    $region8: #{tpu_custom_call.1} parent=1 // pred_region
      %26 = vsyncadd [#allocation7], 0
      %s27 = sshll.u32 %s1, 4
      %s28 = int_to_ptr.hbm [resolvable:$true] %s27
      %s29 = sshll.u32 [#allocation6], 4
      %s30 = int_to_ptr.vmem [resolvable:$true] %s29
      %35 = dma.hbm_to_vmem [thread:$0]  %s28, 2048, %s30, [#allocation7], 128, 128, 8
    $region9: #{tpu_custom_call.1} parent=1 // pred_fallthru
      _
    // Predicated region
    $region10: #{tpu_custom_call.1} parent=1 // pred_check
      _
    $region11: #{tpu_custom_call.1} parent=1 // pred_check_branch
      %37 = sbr.rel (0) target = $region13
    $region12: #{tpu_custom_call.1} parent=1 // pred_region
      %39 = vsyncadd [#allocation7], 0
      %s41 = sshll.u32 %s2, 4
      %s42 = int_to_ptr.hbm [resolvable:$true] %s41
      %s43 = sshll.u32 [#allocation8], 4
      %s44 = int_to_ptr.vmem [resolvable:$true] %s43
      %46 = dma.hbm_to_vmem [thread:$0]  %s42, 32, %s44, [#allocation7]
    $region13: #{tpu_custom_call.1} parent=1 // pred_fallthru
      _
    // Predicated region
    $region14: #{tpu_custom_call.1} parent=1 // pred_check
      _
    $region15: #{tpu_custom_call.1} parent=1 // pred_check_branch
      %48 = sbr.rel (0) target = $region17
    $region16: #{tpu_custom_call.1} parent=1 // pred_region
      %50 = dma.done [#allocation5], 128
    $region17: #{tpu_custom_call.1} parent=1 // pred_fallthru
      _
    // Predicated region
    $region18: #{tpu_custom_call.1} parent=1 // pred_check
      _
    $region19: #{tpu_custom_call.1} parent=1 // pred_check_branch
      %52 = sbr.rel (0) target = $region21
    $region20: #{tpu_custom_call.1} parent=1 // pred_region
      %54 = dma.done [#allocation7], 2048
    $region21: #{tpu_custom_call.1} parent=1 // pred_fallthru
      _
    // Predicated region
    $region22: #{tpu_custom_call.1} parent=1 // pred_check
      _
    $region23: #{tpu_custom_call.1} parent=1 // pred_check_branch
      %56 = sbr.rel (0) target = $region25
    $region24: #{tpu_custom_call.1} parent=1 // pred_region
      %58 = dma.done [#allocation7], 32
    $region25: #{tpu_custom_call.1} parent=1 // pred_fallthru
      _
    %p59 = scmp.eq.s32.totalorder 0, 0
    // Predicated region
    $region26: #{tpu_custom_call.1} parent=1 // pred_check
      %p60 = pneg %p59
    $region27: #{tpu_custom_call.1} parent=1 // pred_check_branch
      %62 = sbr.rel (%p60) target = $region29
    $region28: #{tpu_custom_call.1} parent=1 // pred_region
      %vm63 = vcmask 7168
      %64 = vst.msk [vmem:[#allocation2] sm:$0xff] %vm63, -inf
      %65 = vst.msk [vmem:[#allocation2 + $0x8] sm:$0xff] %vm63, -inf
      %66 = vst.msk [vmem:[#allocation3] sm:$0xff] %vm63, 0.0
      %67 = vst.msk [vmem:[#allocation3 + $0x8] sm:$0xff] %vm63, 0.0
    $region29: #{tpu_custom_call.1} parent=1 // pred_fallthru
      _
    %v68 = vld [vmem:[#allocation4] sm:$0xf]
    %v69 = vld [vmem:[#allocation4 + $0x4] sm:$0xf]
    %v70 = vld [vmem:[#allocation6] sm:$0xff]
    %v71 = vld [vmem:[#allocation6 + $0x8] sm:$0xff]
    %v72 = vld [vmem:[#allocation6 + $0x10] sm:$0xff]
    %v73 = vld [vmem:[#allocation6 + $0x18] sm:$0xff]
    %v74 = vld [vmem:[#allocation6 + $0x20] sm:$0xff]
    %v75 = vld [vmem:[#allocation6 + $0x28] sm:$0xff]
    %v76 = vld [vmem:[#allocation6 + $0x30] sm:$0xff]
    %v77 = vld [vmem:[#allocation6 + $0x38] sm:$0xff]
    %v78 = vld [vmem:[#allocation6 + $0x40] sm:$0xff]
    %v79 = vld [vmem:[#allocation6 + $0x48] sm:$0xff]
    %v80 = vld [vmem:[#allocation6 + $0x50] sm:$0xff]
    %v81 = vld [vmem:[#allocation6 + $0x58] sm:$0xff]
    %v82 = vld [vmem:[#allocation6 + $0x60] sm:$0xff]
    %v83 = vld [vmem:[#allocation6 + $0x68] sm:$0xff]
    %v84 = vld [vmem:[#allocation6 + $0x70] sm:$0xff]
    %v85 = vld [vmem:[#allocation6 + $0x78] sm:$0xff]
    %v86 = vld [vmem:[#allocation8] sm:$0x3]
    %v88 = vperm.slane %v86, 0
    %v89 = vperm.slane %v86, 1
    %v94 = vunpack.c.l.b16 %v68
    %v95 = vunpack.c.l.b16 %v69
    %v96 = vpack.c.b16 %v95, %v94
    %v114 = vunpack.c.l.b16 %v70
    %v115 = vunpack.c.h.b16 %v70
    %v116 = vunpack.c.l.b16 %v71
    %v117 = vunpack.c.h.b16 %v71
    %v118 = vunpack.c.l.b16 %v72
    %v119 = vunpack.c.h.b16 %v72
    %v120 = vunpack.c.l.b16 %v73
    %v121 = vunpack.c.h.b16 %v73
    %v122 = vunpack.c.l.b16 %v74
    %v123 = vunpack.c.h.b16 %v74
    %v124 = vunpack.c.l.b16 %v75
    %v125 = vunpack.c.h.b16 %v75
    %v126 = vunpack.c.l.b16 %v76
    %v127 = vunpack.c.h.b16 %v76
    %v128 = vunpack.c.l.b16 %v77
    %v129 = vunpack.c.h.b16 %v77
    %v130 = vunpack.c.l.b16 %v78
    %v131 = vunpack.c.h.b16 %v78
    %v132 = vunpack.c.l.b16 %v79
    %v133 = vunpack.c.h.b16 %v79
    %v134 = vunpack.c.l.b16 %v80
    %v135 = vunpack.c.h.b16 %v80
    %v136 = vunpack.c.l.b16 %v81
    %v137 = vunpack.c.h.b16 %v81
    %v138 = vunpack.c.l.b16 %v82
    %v139 = vunpack.c.h.b16 %v82
    %v140 = vunpack.c.l.b16 %v83
    %v141 = vunpack.c.h.b16 %v83
    %v142 = vunpack.c.l.b16 %v84
    %v143 = vunpack.c.h.b16 %v84
    %v144 = vunpack.c.l.b16 %v85
    %v145 = vunpack.c.h.b16 %v85
    %v146 = vpack.c.b16 %v116, %v114
    %v147 = vpack.c.b16 %v117, %v115
    %v148 = vpack.c.b16 %v120, %v118
    %v149 = vpack.c.b16 %v121, %v119
    %v150 = vpack.c.b16 %v124, %v122
    %v151 = vpack.c.b16 %v125, %v123
    %v152 = vpack.c.b16 %v128, %v126
    %v153 = vpack.c.b16 %v129, %v127
    %v154 = vpack.c.b16 %v132, %v130
    %v155 = vpack.c.b16 %v133, %v131
    %v156 = vpack.c.b16 %v136, %v134
    %v157 = vpack.c.b16 %v137, %v135
    %v158 = vpack.c.b16 %v140, %v138
    %v159 = vpack.c.b16 %v141, %v139
    %v160 = vpack.c.b16 %v144, %v142
    %v161 = vpack.c.b16 %v145, %v143
    %178 = vmatpush.bf16.msra.mxu0 %v160
    %179 = vmatpush.bf16.msra.mxu0 %v158
    %180 = vmatpush.bf16.msra.mxu0 %v156
    %181 = vmatpush.bf16.msra.mxu0 %v154
    %182 = vmatpush.bf16.msra.mxu0 %v152
    %183 = vmatpush.bf16.msra.mxu0 %v150
    %184 = vmatpush.bf16.msra.mxu0 %v148
    %185 = vmatpush.bf16.msra.mxu0 %v146
    %186 = vmatmul.bf16.gmra.mxu0 %v96
    %v187 = vpop.f32.mrf.mxu0
    %v188 = vadd.f32 %v88, %v187
    %v189 = vpop.f32.mrf.mxu0
    %v190 = vadd.f32 %v88, %v189
    %191 = vdwg.mxu0
    %192 = vmatpush.bf16.msra.mxu0 %v161
    %193 = vmatpush.bf16.msra.mxu0 %v159
    %194 = vmatpush.bf16.msra.mxu0 %v157
    %195 = vmatpush.bf16.msra.mxu0 %v155
    %196 = vmatpush.bf16.msra.mxu0 %v153
    %197 = vmatpush.bf16.msra.mxu0 %v151
    %198 = vmatpush.bf16.msra.mxu0 %v149
    %199 = vmatpush.bf16.msra.mxu0 %v147
    %200 = vmatmul.bf16.gmra.mxu0 %v96
    %v201 = vpop.f32.mrf.mxu0
    %v202 = vadd.f32 %v89, %v201
    %v203 = vpop.f32.mrf.mxu0
    %v204 = vadd.f32 %v89, %v203
    %205 = vdwg.mxu0
    %v206 = vld [vmem:[#allocation2] sm:$0xff]
    %v207 = vld [vmem:[#allocation2 + $0x8] sm:$0xff]
    %v208 = vmax.f32 %v188, %v202
    %209 = vmax.xlane.f32.xlu0 %v208
    %v210 = vpop.xlane.xlu0 %209
    %v211 = vmax.f32 %v190, %v204
    %212 = vmax.xlane.f32.xlu0 %v211
    %v213 = vpop.xlane.xlu0 %212
    %v214 = vmax.f32 %v206, %v210
    %v215 = vmax.f32 %v207, %v213
    %v216 = vld [vmem:[#allocation3] sm:$0xff]
    %v217 = vld [vmem:[#allocation3 + $0x8] sm:$0xff]
    %v218 = vsub.f32 %v206, %v214
    %v219 = vsub.f32 %v207, %v215
    %v220 = vmul.f32 %v218, 1.442695
    %v221 = vpow.pop %v220
    %v222 = vmul.f32 %v219, 1.442695
    %v223 = vpow.pop %v222
    %v224 = vmul.f32 %v216, %v221
    %v225 = vmul.f32 %v217, %v223
    %227 = vset.pattern.permute.xlu0 0
    %228 = vperm.xlu0 %227, %v214
    %v229 = vpop.permute.xlu0 %228
    %232 = vset.pattern.permute.xlu0 0
    %233 = vperm.xlu0 %232, %v215
    %v234 = vpop.permute.xlu0 %233
    %v236 = vsub.f32 %v188, %v229
    %v237 = vsub.f32 %v202, %v229
    %v238 = vsub.f32 %v190, %v234
    %v239 = vsub.f32 %v204, %v234
    %v240 = vmul.f32 %v236, 1.442695
    %v241 = vpow.pop %v240
    %v242 = vmul.f32 %v237, 1.442695
    %v243 = vpow.pop %v242
    %v244 = vmul.f32 %v238, 1.442695
    %v245 = vpow.pop %v244
    %v246 = vmul.f32 %v239, 1.442695
    %v247 = vpow.pop %v246
    %v248 = vadd.f32 %v241, %v243
    %249 = vadd.xlane.f32.xlu0 %v248
    %v250 = vpop.xlane.xlu0 %249
    %v251 = vadd.f32 %v245, %v247
    %252 = vadd.xlane.f32.xlu0 %v251
    %v253 = vpop.xlane.xlu0 %252
    %v254 = vadd.f32 %v224, %v250
    %v255 = vadd.f32 %v225, %v253
    %vm256 = vcmask 7168
    %257 = vst.msk [vmem:[#allocation3] sm:$0xff] %vm256, %v254
    %258 = vst.msk [vmem:[#allocation3 + $0x8] sm:$0xff] %vm256, %v255
    %259 = vst.msk [vmem:[#allocation2] sm:$0xff] %vm256, %v214
    %260 = vst.msk [vmem:[#allocation2 + $0x8] sm:$0xff] %vm256, %v215
    // Predicated region
    $region30: #{tpu_custom_call.1} parent=1 // pred_check
      %p261 = pneg %p59
    $region31: #{tpu_custom_call.1} parent=1 // pred_check_branch
      %263 = sbr.rel (%p261) target = $region33
    $region32: #{tpu_custom_call.1} parent=1 // pred_region
      %v264 = vld [vmem:[#allocation2] sm:$0xff]
      %v265 = vld [vmem:[#allocation2 + $0x8] sm:$0xff]
      %v266 = vld [vmem:[#allocation3] sm:$0xff]
      %v267 = vld [vmem:[#allocation3 + $0x8] sm:$0xff]
      %v268 = vlog2.pop %v266
      %v269 = vmul.f32 %v268, 0.6931472
      %v270 = vlog2.pop %v267
      %v271 = vmul.f32 %v270, 0.6931472
      %v272 = vadd.f32 %v264, %v269
      %v273 = vadd.f32 %v265, %v271
      %274 = vst.msk [vmem:[%s3] sm:$0xff] %vm256, %v272
      %275 = vst.msk [vmem:[%s3 + $0x8] sm:$0xff] %vm256, %v273
    $region33: #{tpu_custom_call.1} parent=1 // pred_fallthru
      _
    // Predicated region
    $region34: #{tpu_custom_call.1} parent=1 // pred_check
      _
    $region35: #{tpu_custom_call.1} parent=1 // pred_check_branch
      %277 = sbr.rel (0) target = $region37
    $region36: #{tpu_custom_call.1} parent=1 // pred_region
      _
    $region37: #{tpu_custom_call.1} parent=1 // pred_fallthru
      _
    // Predicated region
    $region38: #{tpu_custom_call.1} parent=1 // pred_check
      _
    $region39: #{tpu_custom_call.1} parent=1 // pred_check_branch
      %279 = sbr.rel (0) target = $region41
    $region40: #{tpu_custom_call.1} parent=1 // pred_region
      _
    $region41: #{tpu_custom_call.1} parent=1 // pred_fallthru
      _
    %280 = vsyncpa [#allocation5], 1
    %281 = vsyncpa [#allocation7], 1

</llo_original>
